<compile_context>
chip_gen: v6e
topology: v6e:2x2x1
jax: 0.10.0
libtpu: 0.0.40
codegen_flags: <defaults>
</compile_context>

<pallas_src>
import jax
import jax.numpy as jnp
from jax.experimental import pallas as pl
from jax.experimental.pallas import tpu as pltpu

VOCAB_SIZE = 30000
EMBEDDING_DIM = 384      # 3 * 128 -> lane-dense
MAX_TOKENS = 12


def _round_up(x, m):
    return (x + m - 1) // m * m


def _text_encoder_kernel(tok_ref, emb_hbm, pos_ref, out_ref, sem):
    """One grid step: batched embedding-row gather + positional add.

    tok_ref: SMEM (B*S_pad,) int32, scalar-prefetched (clamped, padded) ids
    emb_hbm: HBM ref (VOCAB, D) embedding table (no auto-DMA)
    pos_ref: VMEM (S_pad, D) positional-encoding rows (padded to S_pad)
    out_ref: VMEM (B*S_pad, D) output tile (rows gathered directly into it)
    sem:     single shared DMA-completion semaphore
    """
    rows = out_ref.shape[0]          # B * S_pad (static)
    s_pad = pos_ref.shape[0]
    batch = rows // s_pad

    # Issue all row-gather DMAs up front so the HBM fetches overlap.
    # (Unrolled: rows is small here; for rows >> 100 use a chunked fori_loop.)
    for i in range(rows):
        row_id = tok_ref[i]
        pltpu.make_async_copy(
            emb_hbm.at[pl.ds(row_id, 1), :],
            out_ref.at[pl.ds(i, 1), :],
            sem,
        ).start()

    # Single aggregate wait: its transfer size equals the sum of all started
    # row copies (rows * D elements), so one wait covers the whole gather.
    pltpu.make_async_copy(
        emb_hbm.at[pl.ds(0, rows), :],
        out_ref,
        sem,
    ).wait()

    # Broadcast positional add over the batch, one full-width (S_pad, D)
    # read-add-store per batch element (dense, unmasked stores).
    pos = pos_ref[...]
    for b in range(batch):
        sl = pl.ds(b * s_pad, s_pad)
        out_ref[sl, :] = out_ref[sl, :] + pos


def text_encoder_forward(token_ids, embedding_table, position_encoding):
    """Pallas implementation of TextEncoder.forward.

    Args:
      token_ids:          [B, S] integer (S is truncated to MAX_TOKENS like torch)
      embedding_table:    [VOCAB_SIZE, D] float32
      position_encoding:  [MAX_TOKENS, D] float32 (torch param squeezed of its leading 1)
    Returns:
      [B, S, D] float32
    """
    if token_ids.shape[1] > MAX_TOKENS:
        token_ids = token_ids[:, :MAX_TOKENS]
    token_ids = token_ids.astype(jnp.int32)

    B, S = token_ids.shape
    V, D = embedding_table.shape
    S_pad = _round_up(max(S, 8), 8)          # sublane-dense per-batch row count
    rows = B * S_pad

    # Clamp ids so a bad id can never produce an OOB gather DMA; pad each
    # sequence with id 0 (a valid row) so every output row is written.
    # NOTE: torch nn.Embedding raises on out-of-range ids; here they are clamped.
    tok = jnp.clip(token_ids, 0, V - 1)
    tok = jnp.pad(tok, ((0, 0), (0, S_pad - S))).reshape(rows)

    # Small [S_pad, D] positional slab (~24 KB max); broadcast over B in-kernel.
    pos = position_encoding[:S]
    if S_pad > S:
        pos = jnp.pad(pos, ((0, S_pad - S), (0, 0)))

    # VMEM budget check (output block is double-buffered by the pipeline).
    out_bytes = rows * D * 4
    pos_bytes = S_pad * D * 4
    vmem_needed = 2 * (out_bytes + pos_bytes) + (1 << 20)
    if vmem_needed > (48 << 20):
        # TODO(synk): tile the flattened row axis into a "parallel" grid for
        # very large batches (keeps per-step VMEM bounded, uses both v7x TCs).
        raise ValueError("batch too large for single-step TextEncoder kernel; "
                         "tile the row axis")
    vmem_limit = max(vmem_needed, 16 << 20)

    grid_spec = pltpu.PrefetchScalarGridSpec(
        num_scalar_prefetch=1,               # token ids -> SMEM
        grid=(1,),
        in_specs=[
            pl.BlockSpec(memory_space=pl.ANY),                 # embedding table stays in HBM
            pl.BlockSpec((S_pad, D), lambda i, tok: (0, 0)),   # pos rows resident in VMEM
        ],
        out_specs=pl.BlockSpec((rows, D), lambda i, tok: (0, 0)),
        scratch_shapes=[
            pltpu.SemaphoreType.DMA,                           # ONE shared gather semaphore
        ],
    )

    flat = pl.pallas_call(
        _text_encoder_kernel,
        out_shape=jax.ShapeDtypeStruct((rows, D), embedding_table.dtype),
        grid_spec=grid_spec,
        compiler_params=pltpu.CompilerParams(
            dimension_semantics=("arbitrary",),
            vmem_limit_bytes=vmem_limit,
        ),
    )(tok, embedding_table, pos)

    return flat.reshape(B, S_pad, D)[:, :S, :]


if __name__ == "__main__":
    key = jax.random.PRNGKey(0)
    k_emb, k_pos, k_tok = jax.random.split(key, 3)

    # Deterministic synthetic parameters (shapes from TextEncoder.__init__).
    embedding_table = jax.random.normal(
        k_emb, (VOCAB_SIZE, EMBEDDING_DIM), dtype=jnp.float32)
    # torch inits position_encoding to zeros; use small randoms so the add path
    # is exercised non-trivially.
    position_encoding = 0.01 * jax.random.normal(
        k_pos, (MAX_TOKENS, EMBEDDING_DIM), dtype=jnp.float32)

    # Small example input: batch=2, seq_len=8 (<= max_tokens=12).
    B, S = 2, 8
    token_ids = jax.random.randint(k_tok, (B, S), 0, VOCAB_SIZE, dtype=jnp.int32)

    out = text_encoder_forward(token_ids, embedding_table, position_encoding)
    out = jax.block_until_ready(out)

    # Pure-JAX reference.
    ref = embedding_table[token_ids] + position_encoding[None, :S, :]

    assert out.shape == (B, S, EMBEDDING_DIM), out.shape
    assert jnp.allclose(out, ref, atol=1e-6, rtol=1e-6), "mismatch vs reference"
    print("KERNEL_OK")
</pallas_src>

<mosaic_0001>
module attributes {stable_mosaic.version = 11 : i64} {
  func.func @_text_encoder_kernel(%arg0: i32, %arg1: memref<16xi32, #tpu.memory_space<smem>>, %arg2: memref<30000x384xf32, #tpu.memory_space<any>>, %arg3: memref<8x384xf32, #tpu.memory_space<vmem>>, %arg4: memref<16x384xf32, #tpu.memory_space<vmem>>, %arg5: memref<!tpu.dma_semaphore, #tpu.memory_space<semaphore_mem>>) attributes {dimension_semantics = [#tpu.dimension_semantics<arbitrary>], iteration_bounds = array<i64: 1>, scalar_prefetch = 1 : i64, scratch_operands = 1 : i64, tpu.core_type = #tpu.core_type<tc>, window_params = [{}, {pipeline_mode = #tpu.pipeline_mode<synchronous>, transform_indices = @transform_1, window_bounds = array<i64: 8, 384>}, {pipeline_mode = #tpu.pipeline_mode<synchronous>, transform_indices = @transform_2, window_bounds = array<i64: 16, 384>}]} {
    %c0 = arith.constant 0 : index
    %0 = memref.load %arg1[%c0] : memref<16xi32, #tpu.memory_space<smem>>
    %c0_i32 = arith.constant 0 : i32
    %1 = tpu.memref_slice %arg2[%0, %c0_i32] : memref<30000x384xf32, #tpu.memory_space<any>> -> memref<1x384xf32, #tpu.memory_space<any>>
    %c0_i32_0 = arith.constant 0 : i32
    %c0_i32_1 = arith.constant 0 : i32
    %2 = tpu.memref_slice %arg4[%c0_i32_0, %c0_i32_1] : memref<16x384xf32, #tpu.memory_space<vmem>> -> memref<1x384xf32, #tpu.memory_space<vmem>>
    tpu.enqueue_dma source(%1 : memref<1x384xf32, #tpu.memory_space<any>>) target(%2 : memref<1x384xf32, #tpu.memory_space<vmem>>) target_semaphore(%arg5 : memref<!tpu.dma_semaphore, #tpu.memory_space<semaphore_mem>>)
    %c1 = arith.constant 1 : index
    %3 = memref.load %arg1[%c1] : memref<16xi32, #tpu.memory_space<smem>>
    %c0_i32_2 = arith.constant 0 : i32
    %4 = tpu.memref_slice %arg2[%3, %c0_i32_2] : memref<30000x384xf32, #tpu.memory_space<any>> -> memref<1x384xf32, #tpu.memory_space<any>>
    %c1_i32 = arith.constant 1 : i32
    %c0_i32_3 = arith.constant 0 : i32
    %5 = tpu.memref_slice %arg4[%c1_i32, %c0_i32_3] : memref<16x384xf32, #tpu.memory_space<vmem>> -> memref<1x384xf32, #tpu.memory_space<vmem>>
    tpu.enqueue_dma source(%4 : memref<1x384xf32, #tpu.memory_space<any>>) target(%5 : memref<1x384xf32, #tpu.memory_space<vmem>>) target_semaphore(%arg5 : memref<!tpu.dma_semaphore, #tpu.memory_space<semaphore_mem>>)
    %c2 = arith.constant 2 : index
    %6 = memref.load %arg1[%c2] : memref<16xi32, #tpu.memory_space<smem>>
    %c0_i32_4 = arith.constant 0 : i32
    %7 = tpu.memref_slice %arg2[%6, %c0_i32_4] : memref<30000x384xf32, #tpu.memory_space<any>> -> memref<1x384xf32, #tpu.memory_space<any>>
    %c2_i32 = arith.constant 2 : i32
    %c0_i32_5 = arith.constant 0 : i32
    %8 = tpu.memref_slice %arg4[%c2_i32, %c0_i32_5] : memref<16x384xf32, #tpu.memory_space<vmem>> -> memref<1x384xf32, #tpu.memory_space<vmem>>
    tpu.enqueue_dma source(%7 : memref<1x384xf32, #tpu.memory_space<any>>) target(%8 : memref<1x384xf32, #tpu.memory_space<vmem>>) target_semaphore(%arg5 : memref<!tpu.dma_semaphore, #tpu.memory_space<semaphore_mem>>)
    %c3 = arith.constant 3 : index
    %9 = memref.load %arg1[%c3] : memref<16xi32, #tpu.memory_space<smem>>
    %c0_i32_6 = arith.constant 0 : i32
    %10 = tpu.memref_slice %arg2[%9, %c0_i32_6] : memref<30000x384xf32, #tpu.memory_space<any>> -> memref<1x384xf32, #tpu.memory_space<any>>
    %c3_i32 = arith.constant 3 : i32
    %c0_i32_7 = arith.constant 0 : i32
    %11 = tpu.memref_slice %arg4[%c3_i32, %c0_i32_7] : memref<16x384xf32, #tpu.memory_space<vmem>> -> memref<1x384xf32, #tpu.memory_space<vmem>>
    tpu.enqueue_dma source(%10 : memref<1x384xf32, #tpu.memory_space<any>>) target(%11 : memref<1x384xf32, #tpu.memory_space<vmem>>) target_semaphore(%arg5 : memref<!tpu.dma_semaphore, #tpu.memory_space<semaphore_mem>>)
    %c4 = arith.constant 4 : index
    %12 = memref.load %arg1[%c4] : memref<16xi32, #tpu.memory_space<smem>>
    %c0_i32_8 = arith.constant 0 : i32
    %13 = tpu.memref_slice %arg2[%12, %c0_i32_8] : memref<30000x384xf32, #tpu.memory_space<any>> -> memref<1x384xf32, #tpu.memory_space<any>>
    %c4_i32 = arith.constant 4 : i32
    %c0_i32_9 = arith.constant 0 : i32
    %14 = tpu.memref_slice %arg4[%c4_i32, %c0_i32_9] : memref<16x384xf32, #tpu.memory_space<vmem>> -> memref<1x384xf32, #tpu.memory_space<vmem>>
    tpu.enqueue_dma source(%13 : memref<1x384xf32, #tpu.memory_space<any>>) target(%14 : memref<1x384xf32, #tpu.memory_space<vmem>>) target_semaphore(%arg5 : memref<!tpu.dma_semaphore, #tpu.memory_space<semaphore_mem>>)
    %c5 = arith.constant 5 : index
    %15 = memref.load %arg1[%c5] : memref<16xi32, #tpu.memory_space<smem>>
    %c0_i32_10 = arith.constant 0 : i32
    %16 = tpu.memref_slice %arg2[%15, %c0_i32_10] : memref<30000x384xf32, #tpu.memory_space<any>> -> memref<1x384xf32, #tpu.memory_space<any>>
    %c5_i32 = arith.constant 5 : i32
    %c0_i32_11 = arith.constant 0 : i32
    %17 = tpu.memref_slice %arg4[%c5_i32, %c0_i32_11] : memref<16x384xf32, #tpu.memory_space<vmem>> -> memref<1x384xf32, #tpu.memory_space<vmem>>
    tpu.enqueue_dma source(%16 : memref<1x384xf32, #tpu.memory_space<any>>) target(%17 : memref<1x384xf32, #tpu.memory_space<vmem>>) target_semaphore(%arg5 : memref<!tpu.dma_semaphore, #tpu.memory_space<semaphore_mem>>)
    %c6 = arith.constant 6 : index
    %18 = memref.load %arg1[%c6] : memref<16xi32, #tpu.memory_space<smem>>
    %c0_i32_12 = arith.constant 0 : i32
    %19 = tpu.memref_slice %arg2[%18, %c0_i32_12] : memref<30000x384xf32, #tpu.memory_space<any>> -> memref<1x384xf32, #tpu.memory_space<any>>
    %c6_i32 = arith.constant 6 : i32
    %c0_i32_13 = arith.constant 0 : i32
    %20 = tpu.memref_slice %arg4[%c6_i32, %c0_i32_13] : memref<16x384xf32, #tpu.memory_space<vmem>> -> memref<1x384xf32, #tpu.memory_space<vmem>>
    tpu.enqueue_dma source(%19 : memref<1x384xf32, #tpu.memory_space<any>>) target(%20 : memref<1x384xf32, #tpu.memory_space<vmem>>) target_semaphore(%arg5 : memref<!tpu.dma_semaphore, #tpu.memory_space<semaphore_mem>>)
    %c7 = arith.constant 7 : index
    %21 = memref.load %arg1[%c7] : memref<16xi32, #tpu.memory_space<smem>>
    %c0_i32_14 = arith.constant 0 : i32
    %22 = tpu.memref_slice %arg2[%21, %c0_i32_14] : memref<30000x384xf32, #tpu.memory_space<any>> -> memref<1x384xf32, #tpu.memory_space<any>>
    %c7_i32 = arith.constant 7 : i32
    %c0_i32_15 = arith.constant 0 : i32
    %23 = tpu.memref_slice %arg4[%c7_i32, %c0_i32_15] : memref<16x384xf32, #tpu.memory_space<vmem>> -> memref<1x384xf32, #tpu.memory_space<vmem>>
    tpu.enqueue_dma source(%22 : memref<1x384xf32, #tpu.memory_space<any>>) target(%23 : memref<1x384xf32, #tpu.memory_space<vmem>>) target_semaphore(%arg5 : memref<!tpu.dma_semaphore, #tpu.memory_space<semaphore_mem>>)
    %c8 = arith.constant 8 : index
    %24 = memref.load %arg1[%c8] : memref<16xi32, #tpu.memory_space<smem>>
    %c0_i32_16 = arith.constant 0 : i32
    %25 = tpu.memref_slice %arg2[%24, %c0_i32_16] : memref<30000x384xf32, #tpu.memory_space<any>> -> memref<1x384xf32, #tpu.memory_space<any>>
    %c8_i32 = arith.constant 8 : i32
    %c0_i32_17 = arith.constant 0 : i32
    %26 = tpu.memref_slice %arg4[%c8_i32, %c0_i32_17] : memref<16x384xf32, #tpu.memory_space<vmem>> -> memref<1x384xf32, #tpu.memory_space<vmem>>
    tpu.enqueue_dma source(%25 : memref<1x384xf32, #tpu.memory_space<any>>) target(%26 : memref<1x384xf32, #tpu.memory_space<vmem>>) target_semaphore(%arg5 : memref<!tpu.dma_semaphore, #tpu.memory_space<semaphore_mem>>)
    %c9 = arith.constant 9 : index
    %27 = memref.load %arg1[%c9] : memref<16xi32, #tpu.memory_space<smem>>
    %c0_i32_18 = arith.constant 0 : i32
    %28 = tpu.memref_slice %arg2[%27, %c0_i32_18] : memref<30000x384xf32, #tpu.memory_space<any>> -> memref<1x384xf32, #tpu.memory_space<any>>
    %c9_i32 = arith.constant 9 : i32
    %c0_i32_19 = arith.constant 0 : i32
    %29 = tpu.memref_slice %arg4[%c9_i32, %c0_i32_19] : memref<16x384xf32, #tpu.memory_space<vmem>> -> memref<1x384xf32, #tpu.memory_space<vmem>>
    tpu.enqueue_dma source(%28 : memref<1x384xf32, #tpu.memory_space<any>>) target(%29 : memref<1x384xf32, #tpu.memory_space<vmem>>) target_semaphore(%arg5 : memref<!tpu.dma_semaphore, #tpu.memory_space<semaphore_mem>>)
    %c10 = arith.constant 10 : index
    %30 = memref.load %arg1[%c10] : memref<16xi32, #tpu.memory_space<smem>>
    %c0_i32_20 = arith.constant 0 : i32
    %31 = tpu.memref_slice %arg2[%30, %c0_i32_20] : memref<30000x384xf32, #tpu.memory_space<any>> -> memref<1x384xf32, #tpu.memory_space<any>>
    %c10_i32 = arith.constant 10 : i32
    %c0_i32_21 = arith.constant 0 : i32
    %32 = tpu.memref_slice %arg4[%c10_i32, %c0_i32_21] : memref<16x384xf32, #tpu.memory_space<vmem>> -> memref<1x384xf32, #tpu.memory_space<vmem>>
    tpu.enqueue_dma source(%31 : memref<1x384xf32, #tpu.memory_space<any>>) target(%32 : memref<1x384xf32, #tpu.memory_space<vmem>>) target_semaphore(%arg5 : memref<!tpu.dma_semaphore, #tpu.memory_space<semaphore_mem>>)
    %c11 = arith.constant 11 : index
    %33 = memref.load %arg1[%c11] : memref<16xi32, #tpu.memory_space<smem>>
    %c0_i32_22 = arith.constant 0 : i32
    %34 = tpu.memref_slice %arg2[%33, %c0_i32_22] : memref<30000x384xf32, #tpu.memory_space<any>> -> memref<1x384xf32, #tpu.memory_space<any>>
    %c11_i32 = arith.constant 11 : i32
    %c0_i32_23 = arith.constant 0 : i32
    %35 = tpu.memref_slice %arg4[%c11_i32, %c0_i32_23] : memref<16x384xf32, #tpu.memory_space<vmem>> -> memref<1x384xf32, #tpu.memory_space<vmem>>
    tpu.enqueue_dma source(%34 : memref<1x384xf32, #tpu.memory_space<any>>) target(%35 : memref<1x384xf32, #tpu.memory_space<vmem>>) target_semaphore(%arg5 : memref<!tpu.dma_semaphore, #tpu.memory_space<semaphore_mem>>)
    %c12 = arith.constant 12 : index
    %36 = memref.load %arg1[%c12] : memref<16xi32, #tpu.memory_space<smem>>
    %c0_i32_24 = arith.constant 0 : i32
    %37 = tpu.memref_slice %arg2[%36, %c0_i32_24] : memref<30000x384xf32, #tpu.memory_space<any>> -> memref<1x384xf32, #tpu.memory_space<any>>
    %c12_i32 = arith.constant 12 : i32
    %c0_i32_25 = arith.constant 0 : i32
    %38 = tpu.memref_slice %arg4[%c12_i32, %c0_i32_25] : memref<16x384xf32, #tpu.memory_space<vmem>> -> memref<1x384xf32, #tpu.memory_space<vmem>>
    tpu.enqueue_dma source(%37 : memref<1x384xf32, #tpu.memory_space<any>>) target(%38 : memref<1x384xf32, #tpu.memory_space<vmem>>) target_semaphore(%arg5 : memref<!tpu.dma_semaphore, #tpu.memory_space<semaphore_mem>>)
    %c13 = arith.constant 13 : index
    %39 = memref.load %arg1[%c13] : memref<16xi32, #tpu.memory_space<smem>>
    %c0_i32_26 = arith.constant 0 : i32
    %40 = tpu.memref_slice %arg2[%39, %c0_i32_26] : memref<30000x384xf32, #tpu.memory_space<any>> -> memref<1x384xf32, #tpu.memory_space<any>>
    %c13_i32 = arith.constant 13 : i32
    %c0_i32_27 = arith.constant 0 : i32
    %41 = tpu.memref_slice %arg4[%c13_i32, %c0_i32_27] : memref<16x384xf32, #tpu.memory_space<vmem>> -> memref<1x384xf32, #tpu.memory_space<vmem>>
    tpu.enqueue_dma source(%40 : memref<1x384xf32, #tpu.memory_space<any>>) target(%41 : memref<1x384xf32, #tpu.memory_space<vmem>>) target_semaphore(%arg5 : memref<!tpu.dma_semaphore, #tpu.memory_space<semaphore_mem>>)
    %c14 = arith.constant 14 : index
    %42 = memref.load %arg1[%c14] : memref<16xi32, #tpu.memory_space<smem>>
    %c0_i32_28 = arith.constant 0 : i32
    %43 = tpu.memref_slice %arg2[%42, %c0_i32_28] : memref<30000x384xf32, #tpu.memory_space<any>> -> memref<1x384xf32, #tpu.memory_space<any>>
    %c14_i32 = arith.constant 14 : i32
    %c0_i32_29 = arith.constant 0 : i32
    %44 = tpu.memref_slice %arg4[%c14_i32, %c0_i32_29] : memref<16x384xf32, #tpu.memory_space<vmem>> -> memref<1x384xf32, #tpu.memory_space<vmem>>
    tpu.enqueue_dma source(%43 : memref<1x384xf32, #tpu.memory_space<any>>) target(%44 : memref<1x384xf32, #tpu.memory_space<vmem>>) target_semaphore(%arg5 : memref<!tpu.dma_semaphore, #tpu.memory_space<semaphore_mem>>)
    %c15 = arith.constant 15 : index
    %45 = memref.load %arg1[%c15] : memref<16xi32, #tpu.memory_space<smem>>
    %c0_i32_30 = arith.constant 0 : i32
    %46 = tpu.memref_slice %arg2[%45, %c0_i32_30] : memref<30000x384xf32, #tpu.memory_space<any>> -> memref<1x384xf32, #tpu.memory_space<any>>
    %c15_i32 = arith.constant 15 : i32
    %c0_i32_31 = arith.constant 0 : i32
    %47 = tpu.memref_slice %arg4[%c15_i32, %c0_i32_31] : memref<16x384xf32, #tpu.memory_space<vmem>> -> memref<1x384xf32, #tpu.memory_space<vmem>>
    tpu.enqueue_dma source(%46 : memref<1x384xf32, #tpu.memory_space<any>>) target(%47 : memref<1x384xf32, #tpu.memory_space<vmem>>) target_semaphore(%arg5 : memref<!tpu.dma_semaphore, #tpu.memory_space<semaphore_mem>>)
    %c0_i32_32 = arith.constant 0 : i32
    %c0_i32_33 = arith.constant 0 : i32
    %48 = tpu.memref_slice %arg2[%c0_i32_32, %c0_i32_33] : memref<30000x384xf32, #tpu.memory_space<any>> -> memref<16x384xf32, #tpu.memory_space<any>>
    tpu.wait_dma2 semaphore(%arg5 : memref<!tpu.dma_semaphore, #tpu.memory_space<semaphore_mem>>) src(%48 : memref<16x384xf32, #tpu.memory_space<any>>) dst(%arg4 : memref<16x384xf32, #tpu.memory_space<vmem>>)
    %c0_34 = arith.constant 0 : index
    %c0_35 = arith.constant 0 : index
    %49 = vector.load %arg3[%c0_34, %c0_35] : memref<8x384xf32, #tpu.memory_space<vmem>>, vector<8x384xf32>
    %c0_36 = arith.constant 0 : index
    %c0_37 = arith.constant 0 : index
    %50 = vector.load %arg4[%c0_36, %c0_37] : memref<16x384xf32, #tpu.memory_space<vmem>>, vector<8x384xf32>
    %51 = arith.addf %50, %49 : vector<8x384xf32>
    %c0_38 = arith.constant 0 : index
    %c0_39 = arith.constant 0 : index
    %52 = vector.load %arg4[%c0_38, %c0_39] : memref<16x384xf32, #tpu.memory_space<vmem>>, vector<8x384xf32>
    tpu.vector_store %arg4[%c0_38, %c0_39], %51 {strides = array<i32>} : memref<16x384xf32, #tpu.memory_space<vmem>>, vector<8x384xf32>,
    %c8_40 = arith.constant 8 : index
    %c0_41 = arith.constant 0 : index
    %53 = vector.load %arg4[%c8_40, %c0_41] : memref<16x384xf32, #tpu.memory_space<vmem>>, vector<8x384xf32>
    %54 = arith.addf %53, %49 : vector<8x384xf32>
    %c8_42 = arith.constant 8 : index
    %c0_43 = arith.constant 0 : index
    %55 = vector.load %arg4[%c8_42, %c0_43] : memref<16x384xf32, #tpu.memory_space<vmem>>, vector<8x384xf32>
    tpu.vector_store %arg4[%c8_42, %c0_43], %54 {strides = array<i32>} : memref<16x384xf32, #tpu.memory_space<vmem>>, vector<8x384xf32>,
    return
  }
  func.func @transform_1(%arg0: i32, %arg1: memref<16xi32, #tpu.memory_space<smem>>) -> (i32, i32) {
    %c0_i32 = arith.constant 0 : i32
    %c0_i32_0 = arith.constant 0 : i32
    %c0_i32_1 = arith.constant 0 : i32
    return %c0_i32, %c0_i32_0 : i32, i32
  }
  func.func @transform_2(%arg0: i32, %arg1: memref<16xi32, #tpu.memory_space<smem>>) -> (i32, i32) {
    %c0_i32 = arith.constant 0 : i32
    %c0_i32_0 = arith.constant 0 : i32
    %c0_i32_1 = arith.constant 0 : i32
    return %c0_i32, %c0_i32_0 : i32, i32
  }
}

</mosaic_0001>

<llo_original>
// kernel: tpu_custom_call.1
$region0: #{tpu_custom_call.1}
  #allocation0 [shape = 'u32[]', space=smem, size = 0x4, offset = 0x4, fixed_abs, tag = 'smem constant byte address 0x4 - core index']
  #allocation1 [shape = 'u32[144,128]{1,0:T(1,128)}', space=vmem, size = 0x12000, scoped, tag = 'internal scratch']
  #allocation2 [shape = 's32[1]{0}', space=sflag, size = 0x4, scoped, tag = 'scratch operand']
  #allocation3 [shape = 's32[1]{0}', space=sflag, size = 0x4, scoped, tag = 'scoped memory for tpu_custom_call.1']
  #allocation4 [shape = 'u8[512]{0}', space=smem, size = 0x200, scoped, tag = 'prefetched SMEM operand 0']
  #allocation9 [shape = 's32[]', space=sflag, size = 0x4, offset = 0, fixed_abs, tag = 'sflag constant byte address 0x0 - dummy sync flag']
  #allocation10 [shape = 's32[]', space=sflag, size = 0x4, offset = 0, fixed_abs, tag = 'sflag constant byte address 0x0 - dummy sync flag']
  #allocation11 [shape = 's32[]', space=sflag, size = 0x4, offset = 0, fixed_abs, tag = 'sflag constant byte address 0x0 - dummy sync flag']
  #allocation12 [shape = 's32[]', space=sflag, size = 0x4, offset = 0, fixed_abs, tag = 'sflag constant byte address 0x0 - dummy sync flag']
  #allocation13 [shape = 's32[]', space=sflag, size = 0x4, offset = 0, fixed_abs, tag = 'sflag constant byte address 0x0 - dummy sync flag']
  #allocation14 [shape = 's32[]', space=sflag, size = 0x4, offset = 0, fixed_abs, tag = 'sflag constant byte address 0x0 - dummy sync flag']
  #allocation15 [shape = 's32[]', space=sflag, size = 0x4, offset = 0, fixed_abs, tag = 'sflag constant byte address 0x0 - dummy sync flag']
  #allocation16 [shape = 's32[]', space=sflag, size = 0x4, offset = 0, fixed_abs, tag = 'sflag constant byte address 0x0 - dummy sync flag']
  #allocation17 [shape = 's32[]', space=sflag, size = 0x4, offset = 0, fixed_abs, tag = 'sflag constant byte address 0x0 - dummy sync flag']
  #allocation18 [shape = 's32[]', space=sflag, size = 0x4, offset = 0, fixed_abs, tag = 'sflag constant byte address 0x0 - dummy sync flag']
  #allocation19 [shape = 's32[]', space=sflag, size = 0x4, offset = 0, fixed_abs, tag = 'sflag constant byte address 0x0 - dummy sync flag']
  #allocation20 [shape = 's32[]', space=sflag, size = 0x4, offset = 0, fixed_abs, tag = 'sflag constant byte address 0x0 - dummy sync flag']
  #allocation21 [shape = 's32[]', space=sflag, size = 0x4, offset = 0, fixed_abs, tag = 'sflag constant byte address 0x0 - dummy sync flag']
  #allocation22 [shape = 's32[]', space=sflag, size = 0x4, offset = 0, fixed_abs, tag = 'sflag constant byte address 0x0 - dummy sync flag']
  #allocation23 [shape = 's32[]', space=sflag, size = 0x4, offset = 0, fixed_abs, tag = 'sflag constant byte address 0x0 - dummy sync flag']
  #allocation24 [shape = 's32[]', space=sflag, size = 0x4, offset = 0, fixed_abs, tag = 'sflag constant byte address 0x0 - dummy sync flag']
  %s0 = inlined_call_operand.hbm [shape: s32[16], index: 0, kind: input, shape index: {}]
  %s1 = inlined_call_operand.hbm [shape: f32[30000,384], index: 1, kind: input, shape index: {}]
  %s2 = inlined_call_operand.hbm [shape: f32[8,384], index: 2, kind: input, shape index: {}]
  %s3 = inlined_call_operand.hbm [shape: f32[16,384], index: 3, kind: output, shape index: {}]
  %s4 = sld [smem:[#allocation0]]
  $region18: #{tpu_custom_call.1} parent=0
    _
  %s6 = ssub.s32 1, %s4
  %s7 = scalar_select 0, %s6, %s4
  %9 = dma.hbm_to_smem %s0, 16, [#allocation4], [#allocation3]
  %10 = dma.done [#allocation3], 16
  %11 = sfence
  $region1: #{tpu_custom_call.1} parent=0
    #allocation5 [shape = 'u8[12288]{0}', space=vmem, size = 0x3000, scoped, tag = 'input window, operand 2, single buffered']
    #allocation6 [shape = 's32[1]{0}', space=sflag, size = 0x4, scoped, tag = 'scoped memory for tpu_custom_call.1']
    #allocation7 [shape = 's32[1]{0}', space=sflag, size = 0x4, scoped, tag = 'scoped memory for tpu_custom_call.1']
    #allocation8 [shape = 'u8[24576]{0}', space=vmem, size = 0x6000, scoped, tag = 'output window, operand 0, single buffered']
    %12 = vsyncpa [#allocation6], 0
    %13 = vsyncpa [#allocation7], 0
    // Predicated region
    $region2: #{tpu_custom_call.1} parent=1 // pred_check
      _
    $region3: #{tpu_custom_call.1} parent=1 // pred_check_branch
      %15 = sbr.rel (0) target = $region5
    $region4: #{tpu_custom_call.1} parent=1 // pred_region
      %s17 = ssub.s32 384, 384
      %18 = vsyncadd [#allocation6], %s17
      %s20 = sshll.u32 [#allocation5], 4
      %s21 = int_to_ptr.vmem [resolvable:$true] %s20
      %23 = dma.hbm_to_vmem [thread:$0]  %s2, 384, %s21, [#allocation6]
    $region5: #{tpu_custom_call.1} parent=1 // pred_fallthru
      _
    // Predicated region
    $region6: #{tpu_custom_call.1} parent=1 // pred_check
      _
    $region7: #{tpu_custom_call.1} parent=1 // pred_check_branch
      %25 = sbr.rel (0) target = $region9
    $region8: #{tpu_custom_call.1} parent=1 // pred_region
      %26 = dma.done [#allocation6], 384
    $region9: #{tpu_custom_call.1} parent=1 // pred_fallthru
      _
    %s27 = sld [smem:[#allocation4]]
    %s28 = sshrl.u32 %s27, 3
    %s29 = sand.u32 %s27, 7
    %s30 = smul.u32 %s28, 24
    %s31 = sadd.s32 %s29, %s30
    %s32 = smul.addr %s31, 16
    %s33 = scalar_lea.hbm %s1, %s32
    %s35 = sshll.u32 [#allocation8], 4
    %s36 = int_to_ptr.vmem [resolvable:$true] %s35
    %38 = dma.hbm_to_vmem [thread:$0]  %s33, 48, %s36, [#allocation2], 128, 128, 1
    %s39 = sld [smem:[#allocation4 + $0x1]]
    %s40 = sshrl.u32 %s39, 3
    %s41 = sand.u32 %s39, 7
    %s42 = smul.u32 %s40, 24
    %s43 = sadd.s32 %s41, %s42
    %s44 = smul.addr %s43, 16
    %s45 = scalar_lea.hbm %s1, %s44
    %s46 = scalar_lea.vmem [#allocation8], 1
    %s48 = sshll.u32 %s46, 4
    %s49 = int_to_ptr.vmem [resolvable:$true] %s48
    %51 = dma.hbm_to_vmem [thread:$0]  %s45, 48, %s49, [#allocation2], 128, 128, 1
    %s52 = sld [smem:[#allocation4 + $0x2]]
    %s53 = sshrl.u32 %s52, 3
    %s54 = sand.u32 %s52, 7
    %s55 = smul.u32 %s53, 24
    %s56 = sadd.s32 %s54, %s55
    %s57 = smul.addr %s56, 16
    %s58 = scalar_lea.hbm %s1, %s57
    %s59 = scalar_lea.vmem [#allocation8], 2
    %s61 = sshll.u32 %s59, 4
    %s62 = int_to_ptr.vmem [resolvable:$true] %s61
    %64 = dma.hbm_to_vmem [thread:$0]  %s58, 48, %s62, [#allocation2], 128, 128, 1
    %s65 = sld [smem:[#allocation4 + $0x3]]
    %s66 = sshrl.u32 %s65, 3
    %s67 = sand.u32 %s65, 7
    %s68 = smul.u32 %s66, 24
    %s69 = sadd.s32 %s67, %s68
    %s70 = smul.addr %s69, 16
    %s71 = scalar_lea.hbm %s1, %s70
    %s72 = scalar_lea.vmem [#allocation8], 3
    %s74 = sshll.u32 %s72, 4
    %s75 = int_to_ptr.vmem [resolvable:$true] %s74
    %77 = dma.hbm_to_vmem [thread:$0]  %s71, 48, %s75, [#allocation2], 128, 128, 1
    %s78 = sld [smem:[#allocation4 + $0x4]]
    %s79 = sshrl.u32 %s78, 3
    %s80 = sand.u32 %s78, 7
    %s81 = smul.u32 %s79, 24
    %s82 = sadd.s32 %s80, %s81
    %s83 = smul.addr %s82, 16
    %s84 = scalar_lea.hbm %s1, %s83
    %s85 = scalar_lea.vmem [#allocation8], 4
    %s87 = sshll.u32 %s85, 4
    %s88 = int_to_ptr.vmem [resolvable:$true] %s87
    %90 = dma.hbm_to_vmem [thread:$0]  %s84, 48, %s88, [#allocation2], 128, 128, 1
    %s91 = sld [smem:[#allocation4 + $0x5]]
    %s92 = sshrl.u32 %s91, 3
    %s93 = sand.u32 %s91, 7
    %s94 = smul.u32 %s92, 24
    %s95 = sadd.s32 %s93, %s94
    %s96 = smul.addr %s95, 16
    %s97 = scalar_lea.hbm %s1, %s96
    %s98 = scalar_lea.vmem [#allocation8], 5
    %s100 = sshll.u32 %s98, 4
    %s101 = int_to_ptr.vmem [resolvable:$true] %s100
    %103 = dma.hbm_to_vmem [thread:$0]  %s97, 48, %s101, [#allocation2], 128, 128, 1
    %s104 = sld [smem:[#allocation4 + $0x6]]
    %s105 = sshrl.u32 %s104, 3
    %s106 = sand.u32 %s104, 7
    %s107 = smul.u32 %s105, 24
    %s108 = sadd.s32 %s106, %s107
    %s109 = smul.addr %s108, 16
    %s110 = scalar_lea.hbm %s1, %s109
    %s111 = scalar_lea.vmem [#allocation8], 6
    %s113 = sshll.u32 %s111, 4
    %s114 = int_to_ptr.vmem [resolvable:$true] %s113
    %116 = dma.hbm_to_vmem [thread:$0]  %s110, 48, %s114, [#allocation2], 128, 128, 1
    %s117 = sld [smem:[#allocation4 + $0x7]]
    %s118 = sshrl.u32 %s117, 3
    %s119 = sand.u32 %s117, 7
    %s120 = smul.u32 %s118, 24
    %s121 = sadd.s32 %s119, %s120
    %s122 = smul.addr %s121, 16
    %s123 = scalar_lea.hbm %s1, %s122
    %s124 = scalar_lea.vmem [#allocation8], 7
    %s126 = sshll.u32 %s124, 4
    %s127 = int_to_ptr.vmem [resolvable:$true] %s126
    %129 = dma.hbm_to_vmem [thread:$0]  %s123, 48, %s127, [#allocation2], 128, 128, 1
    %s130 = sld [smem:[#allocation4 + $0x8]]
    %s131 = sshrl.u32 %s130, 3
    %s132 = sand.u32 %s130, 7
    %s133 = smul.u32 %s131, 24
    %s134 = sadd.s32 %s132, %s133
    %s135 = smul.addr %s134, 16
    %s136 = scalar_lea.hbm %s1, %s135
    %s137 = scalar_lea.vmem [#allocation8], 24
    %s139 = sshll.u32 %s137, 4
    %s140 = int_to_ptr.vmem [resolvable:$true] %s139
    %142 = dma.hbm_to_vmem [thread:$0]  %s136, 48, %s140, [#allocation2], 128, 128, 1
    %s143 = sld [smem:[#allocation4 + $0x9]]
    %s144 = sshrl.u32 %s143, 3
    %s145 = sand.u32 %s143, 7
    %s146 = smul.u32 %s144, 24
    %s147 = sadd.s32 %s145, %s146
    %s148 = smul.addr %s147, 16
    %s149 = scalar_lea.hbm %s1, %s148
    %s150 = scalar_lea.vmem [#allocation8], 25
    %s152 = sshll.u32 %s150, 4
    %s153 = int_to_ptr.vmem [resolvable:$true] %s152
    %155 = dma.hbm_to_vmem [thread:$0]  %s149, 48, %s153, [#allocation2], 128, 128, 1
    %s156 = sld [smem:[#allocation4 + $0xa]]
    %s157 = sshrl.u32 %s156, 3
    %s158 = sand.u32 %s156, 7
    %s159 = smul.u32 %s157, 24
    %s160 = sadd.s32 %s158, %s159
    %s161 = smul.addr %s160, 16
    %s162 = scalar_lea.hbm %s1, %s161
    %s163 = scalar_lea.vmem [#allocation8], 26
    %s165 = sshll.u32 %s163, 4
    %s166 = int_to_ptr.vmem [resolvable:$true] %s165
    %168 = dma.hbm_to_vmem [thread:$0]  %s162, 48, %s166, [#allocation2], 128, 128, 1
    %s169 = sld [smem:[#allocation4 + $0xb]]
    %s170 = sshrl.u32 %s169, 3
    %s171 = sand.u32 %s169, 7
    %s172 = smul.u32 %s170, 24
    %s173 = sadd.s32 %s171, %s172
    %s174 = smul.addr %s173, 16
    %s175 = scalar_lea.hbm %s1, %s174
    %s176 = scalar_lea.vmem [#allocation8], 27
    %s178 = sshll.u32 %s176, 4
    %s179 = int_to_ptr.vmem [resolvable:$true] %s178
    %181 = dma.hbm_to_vmem [thread:$0]  %s175, 48, %s179, [#allocation2], 128, 128, 1
    %s182 = sld [smem:[#allocation4 + $0xc]]
    %s183 = sshrl.u32 %s182, 3
    %s184 = sand.u32 %s182, 7
    %s185 = smul.u32 %s183, 24
    %s186 = sadd.s32 %s184, %s185
    %s187 = smul.addr %s186, 16
    %s188 = scalar_lea.hbm %s1, %s187
    %s189 = scalar_lea.vmem [#allocation8], 28
    %s191 = sshll.u32 %s189, 4
    %s192 = int_to_ptr.vmem [resolvable:$true] %s191
    %194 = dma.hbm_to_vmem [thread:$0]  %s188, 48, %s192, [#allocation2], 128, 128, 1
    %s195 = sld [smem:[#allocation4 + $0xd]]
    %s196 = sshrl.u32 %s195, 3
    %s197 = sand.u32 %s195, 7
    %s198 = smul.u32 %s196, 24
    %s199 = sadd.s32 %s197, %s198
    %s200 = smul.addr %s199, 16
    %s201 = scalar_lea.hbm %s1, %s200
    %s202 = scalar_lea.vmem [#allocation8], 29
    %s204 = sshll.u32 %s202, 4
    %s205 = int_to_ptr.vmem [resolvable:$true] %s204
    %207 = dma.hbm_to_vmem [thread:$0]  %s201, 48, %s205, [#allocation2], 128, 128, 1
    %s208 = sld [smem:[#allocation4 + $0xe]]
    %s209 = sshrl.u32 %s208, 3
    %s210 = sand.u32 %s208, 7
    %s211 = smul.u32 %s209, 24
    %s212 = sadd.s32 %s210, %s211
    %s213 = smul.addr %s212, 16
    %s214 = scalar_lea.hbm %s1, %s213
    %s215 = scalar_lea.vmem [#allocation8], 30
    %s217 = sshll.u32 %s215, 4
    %s218 = int_to_ptr.vmem [resolvable:$true] %s217
    %220 = dma.hbm_to_vmem [thread:$0]  %s214, 48, %s218, [#allocation2], 128, 128, 1
    %s221 = sld [smem:[#allocation4 + $0xf]]
    %s222 = sshrl.u32 %s221, 3
    %s223 = sand.u32 %s221, 7
    %s224 = smul.u32 %s222, 24
    %s225 = sadd.s32 %s223, %s224
    %s226 = smul.addr %s225, 16
    %s227 = scalar_lea.hbm %s1, %s226
    %s228 = scalar_lea.vmem [#allocation8], 31
    %s230 = sshll.u32 %s228, 4
    %s231 = int_to_ptr.vmem [resolvable:$true] %s230
    %233 = dma.hbm_to_vmem [thread:$0]  %s227, 48, %s231, [#allocation2], 128, 128, 1
    %s234 = smul.u32 8, 2
    %s235 = smul.u32 %s234, 3
    %s236 = sshll.u32 %s235, 4
    %237 = dma.done [#allocation2], %s236
    %v238 = vld [vmem:[#allocation5] sm:$0xff]
    %v239 = vld [vmem:[#allocation5 + $0x8] sm:$0xff]
    %v240 = vld [vmem:[#allocation5 + $0x10] sm:$0xff]
    %v241 = vld [vmem:[#allocation8] sm:$0xff]
    %v242 = vld [vmem:[#allocation8 + $0x8] sm:$0xff]
    %v243 = vld [vmem:[#allocation8 + $0x10] sm:$0xff]
    %v244 = vadd.f32 %v241, %v238
    %v245 = vadd.f32 %v242, %v239
    %v246 = vadd.f32 %v243, %v240
    %247 = vst [vmem:[#allocation8] sm:$0xff] %v244
    %248 = vst [vmem:[#allocation8 + $0x8] sm:$0xff] %v245
    %249 = vst [vmem:[#allocation8 + $0x10] sm:$0xff] %v246
    %v250 = vld [vmem:[#allocation8 + $0x18] sm:$0xff]
    %v251 = vld [vmem:[#allocation8 + $0x20] sm:$0xff]
    %v252 = vld [vmem:[#allocation8 + $0x28] sm:$0xff]
    %v253 = vadd.f32 %v250, %v238
    %v254 = vadd.f32 %v251, %v239
    %v255 = vadd.f32 %v252, %v240
    %256 = vst [vmem:[#allocation8 + $0x18] sm:$0xff] %v253
    %257 = vst [vmem:[#allocation8 + $0x20] sm:$0xff] %v254
    %258 = vst [vmem:[#allocation8 + $0x28] sm:$0xff] %v255
    // Predicated region
    $region10: #{tpu_custom_call.1} parent=1 // pred_check
      _
    $region11: #{tpu_custom_call.1} parent=1 // pred_check_branch
      %260 = sbr.rel (0) target = $region13
    $region12: #{tpu_custom_call.1} parent=1 // pred_region
      %s262 = ssub.s32 768, 768
      %263 = vsyncadd [#allocation7], %s262
      %s264 = sshll.u32 [#allocation8], 4
      %s265 = int_to_ptr.vmem [resolvable:$true] %s264
      %270 = dma.vmem_to_hbm [thread:$0]  %s265, 768, %s3, [#allocation7], 384, 384, 24
    $region13: #{tpu_custom_call.1} parent=1 // pred_fallthru
      _
    // Predicated region
    $region14: #{tpu_custom_call.1} parent=1 // pred_check
      _
    $region15: #{tpu_custom_call.1} parent=1 // pred_check_branch
      %272 = sbr.rel (0) target = $region17
    $region16: #{tpu_custom_call.1} parent=1 // pred_region
      %273 = dma.done [#allocation7], 768
    $region17: #{tpu_custom_call.1} parent=1 // pred_fallthru
      _
    %274 = vsyncpa [#allocation6], 1
    %275 = vsyncpa [#allocation7], 1
  %276 = vsyncmov [#allocation2]
  %s277 = vpop.sfrf %276
  %p278 = scmp.eq.s32.totalorder %s277, 0
  %p279 = pneg %p278
  %281 = shalt.err (%p279)

</llo_original>
